<compile_context>
chip_gen: v6e
topology: v6e:2x2x1
jax: 0.10.0
libtpu: 0.0.40
codegen_flags: <defaults>
</compile_context>

<pallas_src>
import jax
import jax.numpy as jnp
from jax.experimental import pallas as pl
from jax.experimental.pallas import tpu as pltpu

# ----- problem sizes (small, consistent with the 3-D training_shape) ---------
B, T, D = 2, 8, 32
F = T * D                       # 256 flattened features (lane-dense)
TIME_EMB = 32                   # sinusoidal timestep-embedding dim
COND_DIM = 32                   # global conditioning dim
EXTRA = TIME_EMB + COND_DIM     # 64-wide (t_emb ‖ cond) row stream
HIDDEN = 128                    # eps_model hidden width
NUM_TRAIN_TIMESTEPS = 1000      # DEFAULT_TIMESTEPS


def _round_up(x, m):
    return ((x + m - 1) // m) * m


def _choose_tiling(b):
    """Row tile (multiple of 16) and padded batch; >=2 grid steps when possible."""
    bp = _round_up(max(b, 1), 16)
    if bp <= 16:
        return bp, bp                              # tiny demo: single 16-row tile
    row_tile = min(512, _round_up((bp + 1) // 2, 16))
    bp = _round_up(bp, row_tile)
    return row_tile, bp


# ----- noise scheduler setup (diffusers 'squaredcos_cap_v2') -----------------
def _make_alphas_cumprod(num_timesteps=NUM_TRAIN_TIMESTEPS):
    def alpha_bar(t):
        return jnp.cos((t + 0.008) / 1.008 * jnp.pi / 2.0) ** 2
    i = jnp.arange(num_timesteps, dtype=jnp.float32)
    t1 = i / num_timesteps
    t2 = (i + 1.0) / num_timesteps
    betas = jnp.minimum(1.0 - alpha_bar(t2) / alpha_bar(t1), 0.999)
    alphas = 1.0 - betas
    return jnp.cumprod(alphas)


# ----- Pallas kernel: add_noise + eps_model MLP (3 MXU dots, 1 transcendental)
def ddpm_kernel(sample_ref, noise_ref, scales_ref, extra_ref,
                w1_ref, w1e_ref, b1_ref, w2_ref, b2_ref, est_ref):
    # Per-row add_noise scalars: column 0 = sqrt(ac), column 1 = sqrt(1 - ac).
    scales = scales_ref[...]                      # (rows, 2) f32
    sac = scales[:, 0:1]
    s1m = scales[:, 1:2]

    # DDPMScheduler.add_noise in f32 (bf16 inputs upcast on the VPU).
    noisy = (sac * sample_ref[...].astype(jnp.float32)
             + s1m * noise_ref[...].astype(jnp.float32))

    # Layer 1: K=256 MXU dot on noisy data + K=64 dot for (t_emb ‖ cond) + b1.
    h = (jnp.dot(noisy.astype(jnp.bfloat16), w1_ref[...],
                 preferred_element_type=jnp.float32)
         + jnp.dot(extra_ref[...], w1e_ref[...],
                   preferred_element_type=jnp.float32)
         + b1_ref[...])

    # Mish with ONE transcendental:
    #   tanh(softplus(h)) = ((1+e)^2 - 1) / ((1+e)^2 + 1),  e = exp(h)
    # exp is clamped so it never overflows (mish(h) ~ h for h > 20).
    e = jnp.exp(jnp.minimum(h, 20.0))
    q = (1.0 + e) * (1.0 + e)
    h = h * ((q - 1.0) * pl.reciprocal(q + 1.0, approx=True))

    # Layer 2: MXU dot back to F features.
    est = jnp.dot(h.astype(jnp.bfloat16), w2_ref[...],
                  preferred_element_type=jnp.float32) + b2_ref[...]
    est_ref[...] = est.astype(est_ref.dtype)


# ----- wrapper ----------------------------------------------------------------
def ddpm_forward(sample, global_cond, params, key):
    """Returns (estimated_noise, noise), matching DDPM.forward semantics."""
    b = sample.shape[0]
    key_t, key_n = jax.random.split(key)

    # timesteps = randint(0, num_train_timesteps, (B,))   [forward default path]
    timesteps = jax.random.randint(key_t, (b,), 0, NUM_TRAIN_TIMESTEPS)
    # noise = randn(sample.shape)   (returned in f32, as in the module)
    noise = jax.random.normal(key_n, sample.shape, dtype=jnp.float32)

    alphas_cumprod = _make_alphas_cumprod()
    ac_t = alphas_cumprod[timesteps]
    # Merged per-row scalar stream: [:, 0] = sqrt(ac), [:, 1] = sqrt(1 - ac).
    scales = jnp.stack([jnp.sqrt(ac_t), jnp.sqrt(1.0 - ac_t)],
                       axis=-1).astype(jnp.float32)                  # (b, 2)

    # Sinusoidal timestep embedding (glue, tiny).
    half = TIME_EMB // 2
    freqs = jnp.exp(-jnp.log(10000.0) * jnp.arange(half, dtype=jnp.float32) / half)
    ang = timesteps.astype(jnp.float32)[:, None] * freqs[None, :]
    t_emb = jnp.concatenate([jnp.sin(ang), jnp.cos(ang)], axis=-1)

    # 64-wide (t_emb ‖ cond) row stream, bf16 (halves its DMA).
    extra = jnp.concatenate(
        [t_emb, global_cond.astype(jnp.float32)], axis=-1).astype(jnp.bfloat16)

    # bf16 activation streams (dominant HBM reads halved); kernel upcasts.
    sample_flat = sample.reshape(b, F).astype(jnp.bfloat16)
    noise_flat = noise.reshape(b, F).astype(jnp.bfloat16)

    # Row tiling: multiples of 16 (bf16 sublane packing), >=2 grid steps when
    # possible (v7x megacore), <=512 rows per tile (pipelining / VMEM).
    row_tile, bp = _choose_tiling(b)
    pad = bp - b
    if pad:
        sample_flat = jnp.pad(sample_flat, ((0, pad), (0, 0)))
        noise_flat = jnp.pad(noise_flat, ((0, pad), (0, 0)))
        scales = jnp.pad(scales, ((0, pad), (0, 0)))
        extra = jnp.pad(extra, ((0, pad), (0, 0)))

    # Weights in bf16 (halves weight DMA); biases stay f32; all resident.
    w1 = params["w1s"].astype(jnp.bfloat16)                          # (F, H)
    w1e = jnp.concatenate([params["w1t"], params["w1c"]],
                          axis=0).astype(jnp.bfloat16)               # (EXTRA, H)
    b1 = params["b1"].astype(jnp.float32)                            # (1, H)
    w2 = params["w2"].astype(jnp.bfloat16)                           # (H, F)
    b2 = params["b2"].astype(jnp.float32)                            # (1, F)

    grid = (bp // row_tile,)

    def row_spec(cols):
        return pl.BlockSpec((row_tile, cols), lambda i: (i, 0))

    def const_spec(shape):
        # Same block every grid step -> weights stay resident in VMEM.
        return pl.BlockSpec(shape, lambda i: (0, 0))

    # Advisory cost estimate so XLA schedules the glue around the custom call.
    per_row_bytes = 2 * F * 2 + EXTRA * 2 + 2 * 4 + F * 4
    weight_bytes = (F * HIDDEN + EXTRA * HIDDEN + HIDDEN * F) * 2 + (HIDDEN + F) * 4
    cost = pl.CostEstimate(
        flops=2 * bp * (F + EXTRA) * HIDDEN + 2 * bp * HIDDEN * F,
        transcendentals=bp * HIDDEN,
        bytes_accessed=bp * per_row_bytes + weight_bytes,
    )

    est_flat = pl.pallas_call(
        ddpm_kernel,
        grid=grid,
        in_specs=[
            row_spec(F),                  # sample (bf16)
            row_spec(F),                  # noise  (bf16)
            row_spec(2),                  # [sqrt_ac, sqrt_1m] (f32)
            row_spec(EXTRA),              # (t_emb ‖ cond) (bf16)
            const_spec((F, HIDDEN)),      # w1  (resident, bf16)
            const_spec((EXTRA, HIDDEN)),  # w1e (resident, bf16)
            const_spec((1, HIDDEN)),      # b1  (resident, f32)
            const_spec((HIDDEN, F)),      # w2  (resident, bf16)
            const_spec((1, F)),           # b2  (resident, f32)
        ],
        out_specs=pl.BlockSpec((row_tile, F), lambda i: (i, 0)),
        out_shape=jax.ShapeDtypeStruct((bp, F), jnp.float32),
        compiler_params=pltpu.CompilerParams(
            dimension_semantics=("parallel",)),  # shard row tiles over TCs (v7x)
        cost_estimate=cost,
    )(sample_flat, noise_flat, scales, extra, w1, w1e, b1, w2, b2)

    estimated_noise = est_flat[:b].reshape(sample.shape)
    return estimated_noise, noise


# ----- pure-JAX reference (exact f32 weights / exact Mish) --------------------
def ddpm_forward_reference(sample, global_cond, params, key):
    b = sample.shape[0]
    key_t, key_n = jax.random.split(key)
    timesteps = jax.random.randint(key_t, (b,), 0, NUM_TRAIN_TIMESTEPS)
    noise = jax.random.normal(key_n, sample.shape, dtype=jnp.float32)

    alphas_cumprod = _make_alphas_cumprod()
    ac_t = alphas_cumprod[timesteps]
    sqrt_ac = jnp.sqrt(ac_t).reshape(b, 1)
    sqrt_1m = jnp.sqrt(1.0 - ac_t).reshape(b, 1)

    half = TIME_EMB // 2
    freqs = jnp.exp(-jnp.log(10000.0) * jnp.arange(half, dtype=jnp.float32) / half)
    ang = timesteps.astype(jnp.float32)[:, None] * freqs[None, :]
    t_emb = jnp.concatenate([jnp.sin(ang), jnp.cos(ang)], axis=-1)

    sample_flat = sample.reshape(b, F).astype(jnp.float32)
    noise_flat = noise.reshape(b, F).astype(jnp.float32)
    noisy = sqrt_ac * sample_flat + sqrt_1m * noise_flat

    h = (noisy @ params["w1s"] + t_emb @ params["w1t"]
         + global_cond @ params["w1c"] + params["b1"])
    h = h * jnp.tanh(jax.nn.softplus(h))
    est = h @ params["w2"] + params["b2"]
    return est.reshape(sample.shape), noise


# ----- deterministic parameter init for the synthetic eps_model --------------
def init_params(key):
    ks = jax.random.split(key, 6)
    fan_in1 = F + TIME_EMB + COND_DIM

    def u(k, shape, fan_in):
        lim = 1.0 / jnp.sqrt(jnp.float32(fan_in))
        return jax.random.uniform(k, shape, jnp.float32, -lim, lim)

    return {
        "w1s": u(ks[0], (F, HIDDEN), fan_in1),
        "w1t": u(ks[1], (TIME_EMB, HIDDEN), fan_in1),
        "w1c": u(ks[2], (COND_DIM, HIDDEN), fan_in1),
        "b1":  u(ks[3], (1, HIDDEN), fan_in1),
        "w2":  u(ks[4], (HIDDEN, F), HIDDEN),
        "b2":  u(ks[5], (1, F), HIDDEN),
    }


if __name__ == "__main__":
    key = jax.random.PRNGKey(0)
    k_sample, k_cond, k_param, k_fwd = jax.random.split(key, 4)

    sample = jax.random.normal(k_sample, (B, T, D), jnp.float32)
    global_cond = jax.random.normal(k_cond, (B, COND_DIM), jnp.float32)
    params = init_params(k_param)

    estimated_noise, noise = ddpm_forward(sample, global_cond, params, k_fwd)
    jax.block_until_ready((estimated_noise, noise))

    assert estimated_noise.shape == sample.shape
    assert noise.shape == sample.shape
    assert estimated_noise.dtype == jnp.float32

    # Correctness vs exact-f32 reference (loose tol: bf16 streams + approx rcp).
    est_ref, noise_ref = ddpm_forward_reference(sample, global_cond, params, k_fwd)
    assert jnp.allclose(noise, noise_ref)
    assert bool(jnp.all(jnp.isfinite(estimated_noise)))
    assert bool(jnp.allclose(estimated_noise, est_ref, atol=5e-2, rtol=5e-2))

    # TODO(synk): DDPM.sample() (the reverse-diffusion loop) is inference-only
    # and not part of forward(); not implemented here.
    print("KERNEL_OK")
</pallas_src>

<mosaic_0001>
module attributes {stable_mosaic.version = 11 : i64} {
  func.func @ddpm_kernel(%arg0: i32, %arg1: memref<16x256xbf16, #tpu.memory_space<vmem>>, %arg2: memref<16x256xbf16, #tpu.memory_space<vmem>>, %arg3: memref<16x2xf32, #tpu.memory_space<vmem>>, %arg4: memref<16x64xbf16, #tpu.memory_space<vmem>>, %arg5: memref<256x128xbf16, #tpu.memory_space<vmem>>, %arg6: memref<64x128xbf16, #tpu.memory_space<vmem>>, %arg7: memref<1x128xf32, #tpu.memory_space<vmem>>, %arg8: memref<128x256xbf16, #tpu.memory_space<vmem>>, %arg9: memref<1x256xf32, #tpu.memory_space<vmem>>, %arg10: memref<16x256xf32, #tpu.memory_space<vmem>>) attributes {dimension_semantics = [#tpu.dimension_semantics<parallel>], iteration_bounds = array<i64: 1>, scalar_prefetch = 0 : i64, scratch_operands = 0 : i64, tpu.core_type = #tpu.core_type<tc>, window_params = [{transform_indices = @transform_0, window_bounds = array<i64: 16, 256>}, {transform_indices = @transform_1, window_bounds = array<i64: 16, 256>}, {transform_indices = @transform_2, window_bounds = array<i64: 16, 2>}, {transform_indices = @transform_3, window_bounds = array<i64: 16, 64>}, {pipeline_mode = #tpu.pipeline_mode<synchronous>, transform_indices = @transform_4, window_bounds = array<i64: 256, 128>}, {pipeline_mode = #tpu.pipeline_mode<synchronous>, transform_indices = @transform_5, window_bounds = array<i64: 64, 128>}, {pipeline_mode = #tpu.pipeline_mode<synchronous>, transform_indices = @transform_6, window_bounds = array<i64: 1, 128>}, {pipeline_mode = #tpu.pipeline_mode<synchronous>, transform_indices = @transform_7, window_bounds = array<i64: 128, 256>}, {pipeline_mode = #tpu.pipeline_mode<synchronous>, transform_indices = @transform_8, window_bounds = array<i64: 1, 256>}, {transform_indices = @transform_9, window_bounds = array<i64: 16, 256>}]} {
    %c0 = arith.constant 0 : index
    %c0_0 = arith.constant 0 : index
    %0 = vector.load %arg3[%c0, %c0_0] : memref<16x2xf32, #tpu.memory_space<vmem>>, vector<16x2xf32>
    %1 = vector.extract_strided_slice %0 {offsets = [0, 0], sizes = [16, 1], strides = [1, 1]} : vector<16x2xf32> to vector<16x1xf32>
    %2 = vector.extract_strided_slice %0 {offsets = [0, 1], sizes = [16, 1], strides = [1, 1]} : vector<16x2xf32> to vector<16x1xf32>
    %c0_1 = arith.constant 0 : index
    %c0_2 = arith.constant 0 : index
    %3 = vector.load %arg1[%c0_1, %c0_2] : memref<16x256xbf16, #tpu.memory_space<vmem>>, vector<16x256xbf16>
    %4 = arith.extf %3 : vector<16x256xbf16> to vector<16x256xf32>
    %5 = vector.broadcast %1 : vector<16x1xf32> to vector<16x256xf32>
    %6 = arith.mulf %5, %4 : vector<16x256xf32>
    %c0_3 = arith.constant 0 : index
    %c0_4 = arith.constant 0 : index
    %7 = vector.load %arg2[%c0_3, %c0_4] : memref<16x256xbf16, #tpu.memory_space<vmem>>, vector<16x256xbf16>
    %8 = arith.extf %7 : vector<16x256xbf16> to vector<16x256xf32>
    %9 = vector.broadcast %2 : vector<16x1xf32> to vector<16x256xf32>
    %10 = arith.mulf %9, %8 : vector<16x256xf32>
    %11 = arith.addf %6, %10 : vector<16x256xf32>
    %12 = arith.truncf %11 : vector<16x256xf32> to vector<16x256xbf16>
    %c0_5 = arith.constant 0 : index
    %c0_6 = arith.constant 0 : index
    %13 = vector.load %arg5[%c0_5, %c0_6] : memref<256x128xbf16, #tpu.memory_space<vmem>>, vector<256x128xbf16>
    %cst = arith.constant dense<0.000000e+00> : vector<16x128xf32>
    %14 = tpu.matmul %12, %13, %cst {dimension_numbers = #tpu.dot_dimension_numbers<[1], [0], [0], [1], [0, 0, 1, 1], [], []>} : vector<16x256xbf16>, vector<256x128xbf16>, vector<16x128xf32> -> vector<16x128xf32>
    %c0_7 = arith.constant 0 : index
    %c0_8 = arith.constant 0 : index
    %15 = vector.load %arg4[%c0_7, %c0_8] : memref<16x64xbf16, #tpu.memory_space<vmem>>, vector<16x64xbf16>
    %c0_9 = arith.constant 0 : index
    %c0_10 = arith.constant 0 : index
    %16 = vector.load %arg6[%c0_9, %c0_10] : memref<64x128xbf16, #tpu.memory_space<vmem>>, vector<64x128xbf16>
    %cst_11 = arith.constant dense<0.000000e+00> : vector<16x128xf32>
    %17 = tpu.matmul %15, %16, %cst_11 {dimension_numbers = #tpu.dot_dimension_numbers<[1], [0], [0], [1], [0, 0, 1, 1], [], []>} : vector<16x64xbf16>, vector<64x128xbf16>, vector<16x128xf32> -> vector<16x128xf32>
    %18 = arith.addf %14, %17 : vector<16x128xf32>
    %c0_12 = arith.constant 0 : index
    %c0_13 = arith.constant 0 : index
    %19 = vector.load %arg7[%c0_12, %c0_13] : memref<1x128xf32, #tpu.memory_space<vmem>>, vector<1x128xf32>
    %20 = vector.broadcast %19 : vector<1x128xf32> to vector<16x128xf32>
    %21 = arith.addf %18, %20 : vector<16x128xf32>
    %cst_14 = arith.constant 2.000000e+01 : f32
    %22 = vector.broadcast %cst_14 : f32 to vector<16x128xf32>
    %23 = arith.minimumf %21, %22 : vector<16x128xf32>
    %24 = math.exp %23 : vector<16x128xf32>
    %cst_15 = arith.constant 1.000000e+00 : f32
    %25 = vector.broadcast %cst_15 : f32 to vector<16x128xf32>
    %26 = arith.addf %25, %24 : vector<16x128xf32>
    %cst_16 = arith.constant 1.000000e+00 : f32
    %27 = vector.broadcast %cst_16 : f32 to vector<16x128xf32>
    %28 = arith.addf %27, %24 : vector<16x128xf32>
    %29 = arith.mulf %26, %28 : vector<16x128xf32>
    %cst_17 = arith.constant 1.000000e+00 : f32
    %30 = vector.broadcast %cst_17 : f32 to vector<16x128xf32>
    %31 = arith.subf %29, %30 : vector<16x128xf32>
    %cst_18 = arith.constant 1.000000e+00 : f32
    %32 = vector.broadcast %cst_18 : f32 to vector<16x128xf32>
    %33 = arith.addf %29, %32 : vector<16x128xf32>
    %34 = tpu.reciprocal %33 {approx = true} : vector<16x128xf32> -> vector<16x128xf32>
    %35 = arith.mulf %31, %34 : vector<16x128xf32>
    %36 = arith.mulf %21, %35 : vector<16x128xf32>
    %37 = arith.truncf %36 : vector<16x128xf32> to vector<16x128xbf16>
    %c0_19 = arith.constant 0 : index
    %c0_20 = arith.constant 0 : index
    %38 = vector.load %arg8[%c0_19, %c0_20] : memref<128x256xbf16, #tpu.memory_space<vmem>>, vector<128x256xbf16>
    %cst_21 = arith.constant dense<0.000000e+00> : vector<16x256xf32>
    %39 = tpu.matmul %37, %38, %cst_21 {dimension_numbers = #tpu.dot_dimension_numbers<[1], [0], [0], [1], [0, 0, 1, 1], [], []>} : vector<16x128xbf16>, vector<128x256xbf16>, vector<16x256xf32> -> vector<16x256xf32>
    %c0_22 = arith.constant 0 : index
    %c0_23 = arith.constant 0 : index
    %40 = vector.load %arg9[%c0_22, %c0_23] : memref<1x256xf32, #tpu.memory_space<vmem>>, vector<1x256xf32>
    %41 = vector.broadcast %40 : vector<1x256xf32> to vector<16x256xf32>
    %42 = arith.addf %39, %41 : vector<16x256xf32>
    %c0_24 = arith.constant 0 : index
    %c0_25 = arith.constant 0 : index
    %43 = vector.load %arg10[%c0_24, %c0_25] : memref<16x256xf32, #tpu.memory_space<vmem>>, vector<16x256xf32>
    tpu.vector_store %arg10[%c0_24, %c0_25], %42 {strides = array<i32>} : memref<16x256xf32, #tpu.memory_space<vmem>>, vector<16x256xf32>,
    return
  }
  func.func @transform_0(%arg0: i32) -> (i32, i32) {
    %c0_i32 = arith.constant 0 : i32
    %c0_i32_0 = arith.constant 0 : i32
    return %arg0, %c0_i32 : i32, i32
  }
  func.func @transform_1(%arg0: i32) -> (i32, i32) {
    %c0_i32 = arith.constant 0 : i32
    %c0_i32_0 = arith.constant 0 : i32
    return %arg0, %c0_i32 : i32, i32
  }
  func.func @transform_2(%arg0: i32) -> (i32, i32) {
    %c0_i32 = arith.constant 0 : i32
    %c0_i32_0 = arith.constant 0 : i32
    return %arg0, %c0_i32 : i32, i32
  }
  func.func @transform_3(%arg0: i32) -> (i32, i32) {
    %c0_i32 = arith.constant 0 : i32
    %c0_i32_0 = arith.constant 0 : i32
    return %arg0, %c0_i32 : i32, i32
  }
  func.func @transform_4(%arg0: i32) -> (i32, i32) {
    %c0_i32 = arith.constant 0 : i32
    %c0_i32_0 = arith.constant 0 : i32
    %c0_i32_1 = arith.constant 0 : i32
    return %c0_i32, %c0_i32_0 : i32, i32
  }
  func.func @transform_5(%arg0: i32) -> (i32, i32) {
    %c0_i32 = arith.constant 0 : i32
    %c0_i32_0 = arith.constant 0 : i32
    %c0_i32_1 = arith.constant 0 : i32
    return %c0_i32, %c0_i32_0 : i32, i32
  }
  func.func @transform_6(%arg0: i32) -> (i32, i32) {
    %c0_i32 = arith.constant 0 : i32
    %c0_i32_0 = arith.constant 0 : i32
    %c0_i32_1 = arith.constant 0 : i32
    return %c0_i32, %c0_i32_0 : i32, i32
  }
  func.func @transform_7(%arg0: i32) -> (i32, i32) {
    %c0_i32 = arith.constant 0 : i32
    %c0_i32_0 = arith.constant 0 : i32
    %c0_i32_1 = arith.constant 0 : i32
    return %c0_i32, %c0_i32_0 : i32, i32
  }
  func.func @transform_8(%arg0: i32) -> (i32, i32) {
    %c0_i32 = arith.constant 0 : i32
    %c0_i32_0 = arith.constant 0 : i32
    %c0_i32_1 = arith.constant 0 : i32
    return %c0_i32, %c0_i32_0 : i32, i32
  }
  func.func @transform_9(%arg0: i32) -> (i32, i32) {
    %c0_i32 = arith.constant 0 : i32
    %c0_i32_0 = arith.constant 0 : i32
    return %arg0, %c0_i32 : i32, i32
  }
}

</mosaic_0001>

<llo_original>
// kernel: tpu_custom_call.1
$region0: #{tpu_custom_call.1}
  #allocation0 [shape = 'u32[]', space=smem, size = 0x4, offset = 0x4, fixed_abs, tag = 'smem constant byte address 0x4 - core index']
  #allocation1 [shape = 'u32[144,128]{1,0:T(1,128)}', space=vmem, size = 0x12000, scoped, tag = 'internal scratch']
  %s0 = inlined_call_operand.vmem [shape: bf16[16,256], index: 0, kind: input, shape index: {}]
  %s1 = inlined_call_operand.hbm [shape: bf16[16,256], index: 1, kind: input, shape index: {}]
  %s2 = inlined_call_operand.vmem [shape: f32[16,2], index: 2, kind: input, shape index: {}]
  %s3 = inlined_call_operand.hbm [shape: bf16[16,64], index: 3, kind: input, shape index: {}]
  %s4 = inlined_call_operand.hbm [shape: bf16[256,128], index: 4, kind: input, shape index: {}]
  %s5 = inlined_call_operand.hbm [shape: bf16[64,128], index: 5, kind: input, shape index: {}]
  %s6 = inlined_call_operand.vmem [shape: f32[1,128], index: 6, kind: input, shape index: {}]
  %s7 = inlined_call_operand.hbm [shape: bf16[128,256], index: 7, kind: input, shape index: {}]
  %s8 = inlined_call_operand.vmem [shape: f32[1,256], index: 8, kind: input, shape index: {}]
  %s9 = inlined_call_operand.hbm [shape: f32[16,256], index: 9, kind: output, shape index: {}]
  %s10 = sld [smem:[#allocation0]]
  $region66: #{tpu_custom_call.1} parent=0
    _
  %s12 = ssub.s32 1, %s10
  %s13 = scalar_select 0, %s12, %s10
  $region1: #{tpu_custom_call.1} parent=0
    #allocation2 [shape = 'u8[8192]{0}', space=vmem, size = 0x2000, scoped, tag = 'input window, operand 1, single buffered']
    #allocation3 [shape = 's32[1]{0}', space=sflag, size = 0x4, scoped, tag = 'scoped memory for tpu_custom_call.1']
    #allocation4 [shape = 's32[1]{0}', space=sflag, size = 0x4, scoped, tag = 'scoped memory for tpu_custom_call.1']
    #allocation5 [shape = 'u8[4096]{0}', space=vmem, size = 0x1000, scoped, tag = 'input window, operand 3, single buffered']
    #allocation6 [shape = 's32[1]{0}', space=sflag, size = 0x4, scoped, tag = 'scoped memory for tpu_custom_call.1']
    #allocation7 [shape = 'u8[65536]{0}', space=vmem, size = 0x10000, scoped, tag = 'input window, operand 4, single buffered']
    #allocation8 [shape = 'u8[16384]{0}', space=vmem, size = 0x4000, scoped, tag = 'input window, operand 5, single buffered']
    #allocation9 [shape = 's32[1]{0}', space=sflag, size = 0x4, scoped, tag = 'scoped memory for tpu_custom_call.1']
    #allocation10 [shape = 'u8[65536]{0}', space=vmem, size = 0x10000, scoped, tag = 'input window, operand 7, single buffered']
    #allocation11 [shape = 'u8[16384]{0}', space=vmem, size = 0x4000, scoped, tag = 'output window, operand 0, single buffered']
    %14 = vsyncpa [#allocation3], 0
    %15 = vsyncpa [#allocation6], 0
    %16 = vsyncpa [#allocation9], 0
    %17 = vsyncpa [#allocation4], 0
    // Predicated region
    $region2: #{tpu_custom_call.1} parent=1 // pred_check
      _
    $region3: #{tpu_custom_call.1} parent=1 // pred_check_branch
      %19 = sbr.rel (0) target = $region5
    $region4: #{tpu_custom_call.1} parent=1 // pred_region
      _
    $region5: #{tpu_custom_call.1} parent=1 // pred_fallthru
      _
    // Predicated region
    $region6: #{tpu_custom_call.1} parent=1 // pred_check
      _
    $region7: #{tpu_custom_call.1} parent=1 // pred_check_branch
      %21 = sbr.rel (0) target = $region9
    $region8: #{tpu_custom_call.1} parent=1 // pred_region
      %s23 = ssub.s32 256, 256
      %24 = vsyncadd [#allocation3], %s23
      %s25 = sshll.u32 [#allocation2], 4
      %s26 = int_to_ptr.vmem [resolvable:$true] %s25
      %31 = dma.hbm_to_vmem [thread:$0]  %s1, 256, %s26, [#allocation3], 128, 128, 8
    $region9: #{tpu_custom_call.1} parent=1 // pred_fallthru
      _
    // Predicated region
    $region10: #{tpu_custom_call.1} parent=1 // pred_check
      _
    $region11: #{tpu_custom_call.1} parent=1 // pred_check_branch
      %33 = sbr.rel (0) target = $region13
    $region12: #{tpu_custom_call.1} parent=1 // pred_region
      _
    $region13: #{tpu_custom_call.1} parent=1 // pred_fallthru
      _
    // Predicated region
    $region14: #{tpu_custom_call.1} parent=1 // pred_check
      _
    $region15: #{tpu_custom_call.1} parent=1 // pred_check_branch
      %35 = sbr.rel (0) target = $region17
    $region16: #{tpu_custom_call.1} parent=1 // pred_region
      %s37 = ssub.s32 128, 128
      %38 = vsyncadd [#allocation6], %s37
      %s39 = sshll.u32 [#allocation5], 4
      %s40 = int_to_ptr.vmem [resolvable:$true] %s39
      %45 = dma.hbm_to_vmem [thread:$0]  %s3, 128, %s40, [#allocation6], 64, 64, 4
    $region17: #{tpu_custom_call.1} parent=1 // pred_fallthru
      _
    // Predicated region
    $region18: #{tpu_custom_call.1} parent=1 // pred_check
      _
    $region19: #{tpu_custom_call.1} parent=1 // pred_check_branch
      %47 = sbr.rel (0) target = $region21
    $region20: #{tpu_custom_call.1} parent=1 // pred_region
      %s49 = ssub.s32 2048, 2048
      %50 = vsyncadd [#allocation6], %s49
      %s51 = sshll.u32 [#allocation7], 4
      %s52 = int_to_ptr.vmem [resolvable:$true] %s51
      %57 = dma.hbm_to_vmem [thread:$0]  %s4, 2048, %s52, [#allocation6], 64, 64, 4
    $region21: #{tpu_custom_call.1} parent=1 // pred_fallthru
      _
    // Predicated region
    $region22: #{tpu_custom_call.1} parent=1 // pred_check
      _
    $region23: #{tpu_custom_call.1} parent=1 // pred_check_branch
      %59 = sbr.rel (0) target = $region25
    $region24: #{tpu_custom_call.1} parent=1 // pred_region
      %s61 = ssub.s32 512, 512
      %62 = vsyncadd [#allocation9], %s61
      %s63 = sshll.u32 [#allocation8], 4
      %s64 = int_to_ptr.vmem [resolvable:$true] %s63
      %69 = dma.hbm_to_vmem [thread:$0]  %s5, 512, %s64, [#allocation9], 64, 64, 4
    $region25: #{tpu_custom_call.1} parent=1 // pred_fallthru
      _
    // Predicated region
    $region26: #{tpu_custom_call.1} parent=1 // pred_check
      _
    $region27: #{tpu_custom_call.1} parent=1 // pred_check_branch
      %71 = sbr.rel (0) target = $region29
    $region28: #{tpu_custom_call.1} parent=1 // pred_region
      _
    $region29: #{tpu_custom_call.1} parent=1 // pred_fallthru
      _
    // Predicated region
    $region30: #{tpu_custom_call.1} parent=1 // pred_check
      _
    $region31: #{tpu_custom_call.1} parent=1 // pred_check_branch
      %73 = sbr.rel (0) target = $region33
    $region32: #{tpu_custom_call.1} parent=1 // pred_region
      %s75 = ssub.s32 2048, 2048
      %76 = vsyncadd [#allocation9], %s75
      %s77 = sshll.u32 [#allocation10], 4
      %s78 = int_to_ptr.vmem [resolvable:$true] %s77
      %83 = dma.hbm_to_vmem [thread:$0]  %s7, 2048, %s78, [#allocation9], 128, 128, 8
    $region33: #{tpu_custom_call.1} parent=1 // pred_fallthru
      _
    // Predicated region
    $region34: #{tpu_custom_call.1} parent=1 // pred_check
      _
    $region35: #{tpu_custom_call.1} parent=1 // pred_check_branch
      %85 = sbr.rel (0) target = $region37
    $region36: #{tpu_custom_call.1} parent=1 // pred_region
      _
    $region37: #{tpu_custom_call.1} parent=1 // pred_fallthru
      _
    // Predicated region
    $region38: #{tpu_custom_call.1} parent=1 // pred_check
      _
    $region39: #{tpu_custom_call.1} parent=1 // pred_check_branch
      %87 = sbr.rel (0) target = $region41
    $region40: #{tpu_custom_call.1} parent=1 // pred_region
      %88 = dma.done [#allocation3], 256
    $region41: #{tpu_custom_call.1} parent=1 // pred_fallthru
      _
    // Predicated region
    $region42: #{tpu_custom_call.1} parent=1 // pred_check
      _
    $region43: #{tpu_custom_call.1} parent=1 // pred_check_branch
      %90 = sbr.rel (0) target = $region45
    $region44: #{tpu_custom_call.1} parent=1 // pred_region
      %91 = dma.done [#allocation6], 128
    $region45: #{tpu_custom_call.1} parent=1 // pred_fallthru
      _
    // Predicated region
    $region46: #{tpu_custom_call.1} parent=1 // pred_check
      _
    $region47: #{tpu_custom_call.1} parent=1 // pred_check_branch
      %93 = sbr.rel (0) target = $region49
    $region48: #{tpu_custom_call.1} parent=1 // pred_region
      %94 = dma.done [#allocation6], 2048
    $region49: #{tpu_custom_call.1} parent=1 // pred_fallthru
      _
    // Predicated region
    $region50: #{tpu_custom_call.1} parent=1 // pred_check
      _
    $region51: #{tpu_custom_call.1} parent=1 // pred_check_branch
      %96 = sbr.rel (0) target = $region53
    $region52: #{tpu_custom_call.1} parent=1 // pred_region
      %97 = dma.done [#allocation9], 512
    $region53: #{tpu_custom_call.1} parent=1 // pred_fallthru
      _
    // Predicated region
    $region54: #{tpu_custom_call.1} parent=1 // pred_check
      _
    $region55: #{tpu_custom_call.1} parent=1 // pred_check_branch
      %99 = sbr.rel (0) target = $region57
    $region56: #{tpu_custom_call.1} parent=1 // pred_region
      %100 = dma.done [#allocation9], 2048
    $region57: #{tpu_custom_call.1} parent=1 // pred_fallthru
      _
    %v102 = vld [vmem:[%s2] sm:$0xff]
    %v103 = vld [vmem:[%s2 + $0x8] sm:$0xff]
    %v104 = vld [vmem:[%s0] sm:$0xff]
    %v105 = vld [vmem:[%s0 + $0x8] sm:$0xff]
    %v106 = vunpack.c.l.bf16 %v104
    %v107 = vunpack.c.h.bf16 %v104
    %v108 = vunpack.c.l.bf16 %v105
    %v109 = vunpack.c.h.bf16 %v105
    %111 = vset.pattern.permute.xlu0 0
    %112 = vperm.xlu0 %111, %v102
    %v113 = vpop.permute.xlu0 %112
    %116 = vset.pattern.permute.xlu0 0
    %117 = vperm.xlu0 %116, %v103
    %v118 = vpop.permute.xlu0 %117
    %v120 = vmul.f32 %v113, %v106
    %v121 = vmul.f32 %v113, %v107
    %v122 = vmul.f32 %v118, %v108
    %v123 = vmul.f32 %v118, %v109
    %v124 = vld [vmem:[#allocation2] sm:$0xff]
    %v125 = vld [vmem:[#allocation2 + $0x8] sm:$0xff]
    %v126 = vunpack.c.l.bf16 %v124
    %v127 = vunpack.c.h.bf16 %v124
    %v128 = vunpack.c.l.bf16 %v125
    %v129 = vunpack.c.h.bf16 %v125
    %130 = vset.pattern.permute.xlu0 1
    %131 = vperm.xlu0 %130, %v102
    %v132 = vpop.permute.xlu0 %131
    %134 = vset.pattern.permute.xlu0 1
    %135 = vperm.xlu0 %134, %v103
    %v136 = vpop.permute.xlu0 %135
    %v138 = vmul.f32 %v132, %v126
    %v139 = vmul.f32 %v132, %v127
    %v140 = vmul.f32 %v136, %v128
    %v141 = vmul.f32 %v136, %v129
    %v142 = vadd.f32 %v120, %v138
    %v143 = vadd.f32 %v121, %v139
    %v144 = vadd.f32 %v122, %v140
    %v145 = vadd.f32 %v123, %v141
    %v146 = vpack.c.bf16 %v144, %v142
    %v147 = vpack.c.bf16 %v145, %v143
    %v148 = vld [vmem:[#allocation7] sm:$0xf]
    %v149 = vld [vmem:[#allocation7 + $0x4] sm:$0xf]
    %v150 = vld [vmem:[#allocation7 + $0x8] sm:$0xf]
    %v151 = vld [vmem:[#allocation7 + $0xc] sm:$0xf]
    %v152 = vld [vmem:[#allocation7 + $0x10] sm:$0xf]
    %v153 = vld [vmem:[#allocation7 + $0x14] sm:$0xf]
    %v154 = vld [vmem:[#allocation7 + $0x18] sm:$0xf]
    %v155 = vld [vmem:[#allocation7 + $0x1c] sm:$0xf]
    %v156 = vld [vmem:[#allocation7 + $0x20] sm:$0xf]
    %v157 = vld [vmem:[#allocation7 + $0x24] sm:$0xf]
    %v158 = vld [vmem:[#allocation7 + $0x28] sm:$0xf]
    %v159 = vld [vmem:[#allocation7 + $0x2c] sm:$0xf]
    %v160 = vld [vmem:[#allocation7 + $0x30] sm:$0xf]
    %v161 = vld [vmem:[#allocation7 + $0x34] sm:$0xf]
    %v162 = vld [vmem:[#allocation7 + $0x38] sm:$0xf]
    %v163 = vld [vmem:[#allocation7 + $0x3c] sm:$0xf]
    %v164 = vld [vmem:[#allocation7 + $0x40] sm:$0xf]
    %v165 = vld [vmem:[#allocation7 + $0x44] sm:$0xf]
    %v166 = vld [vmem:[#allocation7 + $0x48] sm:$0xf]
    %v167 = vld [vmem:[#allocation7 + $0x4c] sm:$0xf]
    %v168 = vld [vmem:[#allocation7 + $0x50] sm:$0xf]
    %v169 = vld [vmem:[#allocation7 + $0x54] sm:$0xf]
    %v170 = vld [vmem:[#allocation7 + $0x58] sm:$0xf]
    %v171 = vld [vmem:[#allocation7 + $0x5c] sm:$0xf]
    %v172 = vld [vmem:[#allocation7 + $0x60] sm:$0xf]
    %v173 = vld [vmem:[#allocation7 + $0x64] sm:$0xf]
    %v174 = vld [vmem:[#allocation7 + $0x68] sm:$0xf]
    %v175 = vld [vmem:[#allocation7 + $0x6c] sm:$0xf]
    %v176 = vld [vmem:[#allocation7 + $0x70] sm:$0xf]
    %v177 = vld [vmem:[#allocation7 + $0x74] sm:$0xf]
    %v178 = vld [vmem:[#allocation7 + $0x78] sm:$0xf]
    %v179 = vld [vmem:[#allocation7 + $0x7c] sm:$0xf]
    %v180 = vld [vmem:[#allocation5] sm:$0xf]
    %v181 = vld [vmem:[#allocation5 + $0x4] sm:$0xf]
    %v182 = vld [vmem:[#allocation8] sm:$0xf]
    %v183 = vld [vmem:[#allocation8 + $0x4] sm:$0xf]
    %v184 = vld [vmem:[#allocation8 + $0x8] sm:$0xf]
    %v185 = vld [vmem:[#allocation8 + $0xc] sm:$0xf]
    %v186 = vld [vmem:[#allocation8 + $0x10] sm:$0xf]
    %v187 = vld [vmem:[#allocation8 + $0x14] sm:$0xf]
    %v188 = vld [vmem:[#allocation8 + $0x18] sm:$0xf]
    %v189 = vld [vmem:[#allocation8 + $0x1c] sm:$0xf]
    %v192 = vunpack.c.l.b16 %v180
    %v193 = vunpack.c.l.b16 %v181
    %v194 = vpack.c.b16 %v193, %v192
    %v203 = vunpack.c.l.b16 %v182
    %v204 = vunpack.c.l.b16 %v183
    %v205 = vunpack.c.l.b16 %v184
    %v206 = vunpack.c.l.b16 %v185
    %v207 = vunpack.c.l.b16 %v186
    %v208 = vunpack.c.l.b16 %v187
    %v209 = vunpack.c.l.b16 %v188
    %v210 = vunpack.c.l.b16 %v189
    %v211 = vpack.c.b16 %v204, %v203
    %v212 = vpack.c.b16 %v206, %v205
    %v213 = vpack.c.b16 %v208, %v207
    %v214 = vpack.c.b16 %v210, %v209
    %vm219 = vcmask 523264
    %v221 = vsel %vm219, %v194, 0
    %223 = vmatprep.subr.bf16.mxu0 0
    %224 = vmatpush1.bf16.msra.mxu0 0
    %225 = vmatprep.subr.bf16.mxu0 0
    %226 = vmatpush1.bf16.msra.mxu0 0
    %227 = vmatprep.subr.bf16.mxu0 0
    %228 = vmatpush1.bf16.msra.mxu0 0
    %229 = vmatprep.subr.bf16.mxu0 0
    %230 = vmatpush1.bf16.msra.mxu0 0
    %231 = vmatprep.subr.bf16.mxu0 0
    %232 = vmatpush1.bf16.msra.mxu0 %v214
    %233 = vmatprep.subr.bf16.mxu0 0
    %234 = vmatpush1.bf16.msra.mxu0 %v213
    %235 = vmatprep.subr.bf16.mxu0 0
    %236 = vmatpush1.bf16.msra.mxu0 %v212
    %237 = vmatprep.subr.bf16.mxu0 0
    %238 = vmatpush1.bf16.msra.mxu0 %v211
    %239 = vmatprep.subr.bf16.mxu0 0
    %240 = vmatpush2.bf16.msra.mxu0 0
    %241 = vmatprep.subr.bf16.mxu0 0
    %242 = vmatpush2.bf16.msra.mxu0 0
    %243 = vmatprep.subr.bf16.mxu0 0
    %244 = vmatpush2.bf16.msra.mxu0 0
    %245 = vmatprep.subr.bf16.mxu0 0
    %246 = vmatpush2.bf16.msra.mxu0 0
    %247 = vmatprep.subr.bf16.mxu0 0
    %248 = vmatpush2.bf16.msra.mxu0 0
    %249 = vmatprep.subr.bf16.mxu0 0
    %250 = vmatpush2.bf16.msra.mxu0 0
    %251 = vmatprep.subr.bf16.mxu0 0
    %252 = vmatpush2.bf16.msra.mxu0 0
    %253 = vmatprep.subr.bf16.mxu0 0
    %254 = vmatpush2.bf16.msra.mxu0 0
    %255 = vmatprep.mubr.bf16.mxu0 0
    %256 = vmatmul.mubr.bf16.gmra.mxu0 %v221
    %v257 = vpop.f32.mrf.mxu0
    %v258 = vadd.f32 0.0, %v257
    %v259 = vpop.f32.mrf.mxu0
    %v260 = vpop.f32.mrf.mxu0
    %v261 = vadd.f32 0.0, %v260
    %v262 = vpop.f32.mrf.mxu0
    %263 = vdwg.mxu0
    %v296 = vunpack.c.l.b16 %v148
    %v297 = vunpack.c.l.b16 %v149
    %v298 = vunpack.c.l.b16 %v150
    %v299 = vunpack.c.l.b16 %v151
    %v300 = vunpack.c.l.b16 %v152
    %v301 = vunpack.c.l.b16 %v153
    %v302 = vunpack.c.l.b16 %v154
    %v303 = vunpack.c.l.b16 %v155
    %v304 = vunpack.c.l.b16 %v156
    %v305 = vunpack.c.l.b16 %v157
    %v306 = vunpack.c.l.b16 %v158
    %v307 = vunpack.c.l.b16 %v159
    %v308 = vunpack.c.l.b16 %v160
    %v309 = vunpack.c.l.b16 %v161
    %v310 = vunpack.c.l.b16 %v162
    %v311 = vunpack.c.l.b16 %v163
    %v312 = vunpack.c.l.b16 %v164
    %v313 = vunpack.c.l.b16 %v165
    %v314 = vunpack.c.l.b16 %v166
    %v315 = vunpack.c.l.b16 %v167
    %v316 = vunpack.c.l.b16 %v168
    %v317 = vunpack.c.l.b16 %v169
    %v318 = vunpack.c.l.b16 %v170
    %v319 = vunpack.c.l.b16 %v171
    %v320 = vunpack.c.l.b16 %v172
    %v321 = vunpack.c.l.b16 %v173
    %v322 = vunpack.c.l.b16 %v174
    %v323 = vunpack.c.l.b16 %v175
    %v324 = vunpack.c.l.b16 %v176
    %v325 = vunpack.c.l.b16 %v177
    %v326 = vunpack.c.l.b16 %v178
    %v327 = vunpack.c.l.b16 %v179
    %v328 = vpack.c.b16 %v297, %v296
    %v329 = vpack.c.b16 %v299, %v298
    %v330 = vpack.c.b16 %v301, %v300
    %v331 = vpack.c.b16 %v303, %v302
    %v332 = vpack.c.b16 %v305, %v304
    %v333 = vpack.c.b16 %v307, %v306
    %v334 = vpack.c.b16 %v309, %v308
    %v335 = vpack.c.b16 %v311, %v310
    %v336 = vpack.c.b16 %v313, %v312
    %v337 = vpack.c.b16 %v315, %v314
    %v338 = vpack.c.b16 %v317, %v316
    %v339 = vpack.c.b16 %v319, %v318
    %v340 = vpack.c.b16 %v321, %v320
    %v341 = vpack.c.b16 %v323, %v322
    %v342 = vpack.c.b16 %v325, %v324
    %v343 = vpack.c.b16 %v327, %v326
    %360 = vmatprep.subr.bf16.mxu0 0
    %361 = vmatpush1.bf16.msra.mxu0 %v335
    %362 = vmatprep.subr.bf16.mxu0 0
    %363 = vmatpush1.bf16.msra.mxu0 %v334
    %364 = vmatprep.subr.bf16.mxu0 0
    %365 = vmatpush1.bf16.msra.mxu0 %v333
    %366 = vmatprep.subr.bf16.mxu0 0
    %367 = vmatpush1.bf16.msra.mxu0 %v332
    %368 = vmatprep.subr.bf16.mxu0 0
    %369 = vmatpush1.bf16.msra.mxu0 %v331
    %370 = vmatprep.subr.bf16.mxu0 0
    %371 = vmatpush1.bf16.msra.mxu0 %v330
    %372 = vmatprep.subr.bf16.mxu0 0
    %373 = vmatpush1.bf16.msra.mxu0 %v329
    %374 = vmatprep.subr.bf16.mxu0 0
    %375 = vmatpush1.bf16.msra.mxu0 %v328
    %376 = vmatprep.subr.bf16.mxu0 0
    %377 = vmatpush2.bf16.msra.mxu0 %v343
    %378 = vmatprep.subr.bf16.mxu0 0
    %379 = vmatpush2.bf16.msra.mxu0 %v342
    %380 = vmatprep.subr.bf16.mxu0 0
    %381 = vmatpush2.bf16.msra.mxu0 %v341
    %382 = vmatprep.subr.bf16.mxu0 0
    %383 = vmatpush2.bf16.msra.mxu0 %v340
    %384 = vmatprep.subr.bf16.mxu0 0
    %385 = vmatpush2.bf16.msra.mxu0 %v339
    %386 = vmatprep.subr.bf16.mxu0 0
    %387 = vmatpush2.bf16.msra.mxu0 %v338
    %388 = vmatprep.subr.bf16.mxu0 0
    %389 = vmatpush2.bf16.msra.mxu0 %v337
    %390 = vmatprep.subr.bf16.mxu0 0
    %391 = vmatpush2.bf16.msra.mxu0 %v336
    %392 = vmatprep.mubr.bf16.mxu0 %v147
    %393 = vmatmul.mubr.bf16.gmra.mxu0 %v146
    %v394 = vpop.f32.mrf.mxu0
    %v395 = vadd.f32 %v258, %v394
    %v396 = vpop.f32.mrf.mxu0
    %v397 = vpop.f32.mrf.mxu0
    %v398 = vadd.f32 %v261, %v397
    %v399 = vpop.f32.mrf.mxu0
    %400 = vdwg.mxu0
    %v401 = vld [vmem:[%s6] sm:$0x1]
    %v403 = vlaneseq
    %v404 = vshrl.u32 %v403, 7
    %v405 = vsub.s32 0, %v404
    %v406 = vrot.slane %v401, %v405
    %v408 = vadd.f32 %v395, %v406
    %v409 = vadd.f32 %v398, %v406
    %v410 = vmin.f32 %v408, 20.0
    %v411 = vmin.f32 %v409, 20.0
    %v412 = vmul.f32 %v410, 1.442695
    %v413 = vpow.pop %v412
    %v414 = vmul.f32 %v411, 1.442695
    %v415 = vpow.pop %v414
    %v416 = vadd.f32 %v413, 1.0
    %v417 = vadd.f32 %v415, 1.0
    %v418 = vmul.f32 %v416, %v416
    %v419 = vmul.f32 %v417, %v417
    %v420 = vsub.f32 %v418, 1.0
    %v421 = vsub.f32 %v419, 1.0
    %v422 = vadd.f32 %v418, 1.0
    %v423 = vadd.f32 %v419, 1.0
    %v424 = vrcp.pop %v422
    %v425 = vrcp.pop %v423
    %v426 = vmul.f32 %v420, %v424
    %v427 = vmul.f32 %v421, %v425
    %v428 = vmul.f32 %v408, %v426
    %v429 = vmul.f32 %v409, %v427
    %v430 = vpack.c.bf16 %v429, %v428
    %v431 = vld [vmem:[#allocation10] sm:$0xff]
    %v432 = vld [vmem:[#allocation10 + $0x8] sm:$0xff]
    %v433 = vld [vmem:[#allocation10 + $0x10] sm:$0xff]
    %v434 = vld [vmem:[#allocation10 + $0x18] sm:$0xff]
    %v435 = vld [vmem:[#allocation10 + $0x20] sm:$0xff]
    %v436 = vld [vmem:[#allocation10 + $0x28] sm:$0xff]
    %v437 = vld [vmem:[#allocation10 + $0x30] sm:$0xff]
    %v438 = vld [vmem:[#allocation10 + $0x38] sm:$0xff]
    %v439 = vld [vmem:[#allocation10 + $0x40] sm:$0xff]
    %v440 = vld [vmem:[#allocation10 + $0x48] sm:$0xff]
    %v441 = vld [vmem:[#allocation10 + $0x50] sm:$0xff]
    %v442 = vld [vmem:[#allocation10 + $0x58] sm:$0xff]
    %v443 = vld [vmem:[#allocation10 + $0x60] sm:$0xff]
    %v444 = vld [vmem:[#allocation10 + $0x68] sm:$0xff]
    %v445 = vld [vmem:[#allocation10 + $0x70] sm:$0xff]
    %v446 = vld [vmem:[#allocation10 + $0x78] sm:$0xff]
    %v447 = vld [vmem:[%s8] sm:$0x3]
    %v449 = vlaneseq
    %v450 = vshrl.u32 %v449, 7
    %v451 = vsub.s32 0, %v450
    %v452 = vrot.slane %v447, %v451
    %v453 = vlaneseq
    %v454 = vshrl.u32 %v453, 7
    %v455 = vsub.s32 1, %v454
    %v456 = vrot.slane %v447, %v455
    %v475 = vunpack.c.l.b16 %v431
    %v476 = vunpack.c.h.b16 %v431
    %v477 = vunpack.c.l.b16 %v432
    %v478 = vunpack.c.h.b16 %v432
    %v479 = vunpack.c.l.b16 %v433
    %v480 = vunpack.c.h.b16 %v433
    %v481 = vunpack.c.l.b16 %v434
    %v482 = vunpack.c.h.b16 %v434
    %v483 = vunpack.c.l.b16 %v435
    %v484 = vunpack.c.h.b16 %v435
    %v485 = vunpack.c.l.b16 %v436
    %v486 = vunpack.c.h.b16 %v436
    %v487 = vunpack.c.l.b16 %v437
    %v488 = vunpack.c.h.b16 %v437
    %v489 = vunpack.c.l.b16 %v438
    %v490 = vunpack.c.h.b16 %v438
    %v491 = vunpack.c.l.b16 %v439
    %v492 = vunpack.c.h.b16 %v439
    %v493 = vunpack.c.l.b16 %v440
    %v494 = vunpack.c.h.b16 %v440
    %v495 = vunpack.c.l.b16 %v441
    %v496 = vunpack.c.h.b16 %v441
    %v497 = vunpack.c.l.b16 %v442
    %v498 = vunpack.c.h.b16 %v442
    %v499 = vunpack.c.l.b16 %v443
    %v500 = vunpack.c.h.b16 %v443
    %v501 = vunpack.c.l.b16 %v444
    %v502 = vunpack.c.h.b16 %v444
    %v503 = vunpack.c.l.b16 %v445
    %v504 = vunpack.c.h.b16 %v445
    %v505 = vunpack.c.l.b16 %v446
    %v506 = vunpack.c.h.b16 %v446
    %v507 = vpack.c.b16 %v477, %v475
    %v508 = vpack.c.b16 %v478, %v476
    %v509 = vpack.c.b16 %v481, %v479
    %v510 = vpack.c.b16 %v482, %v480
    %v511 = vpack.c.b16 %v485, %v483
    %v512 = vpack.c.b16 %v486, %v484
    %v513 = vpack.c.b16 %v489, %v487
    %v514 = vpack.c.b16 %v490, %v488
    %v515 = vpack.c.b16 %v493, %v491
    %v516 = vpack.c.b16 %v494, %v492
    %v517 = vpack.c.b16 %v497, %v495
    %v518 = vpack.c.b16 %v498, %v496
    %v519 = vpack.c.b16 %v501, %v499
    %v520 = vpack.c.b16 %v502, %v500
    %v521 = vpack.c.b16 %v505, %v503
    %v522 = vpack.c.b16 %v506, %v504
    %539 = vmatprep.subr.bf16.mxu0 %v522
    %540 = vmatpush1.bf16.msra.mxu0 %v521
    %541 = vmatprep.subr.bf16.mxu0 %v520
    %542 = vmatpush1.bf16.msra.mxu0 %v519
    %543 = vmatprep.subr.bf16.mxu0 %v518
    %544 = vmatpush1.bf16.msra.mxu0 %v517
    %545 = vmatprep.subr.bf16.mxu0 %v516
    %546 = vmatpush1.bf16.msra.mxu0 %v515
    %547 = vmatprep.subr.bf16.mxu0 %v514
    %548 = vmatpush1.bf16.msra.mxu0 %v513
    %549 = vmatprep.subr.bf16.mxu0 %v512
    %550 = vmatpush1.bf16.msra.mxu0 %v511
    %551 = vmatprep.subr.bf16.mxu0 %v510
    %552 = vmatpush1.bf16.msra.mxu0 %v509
    %553 = vmatprep.subr.bf16.mxu0 %v508
    %554 = vmatpush1.bf16.msra.mxu0 %v507
    %555 = vmatprep.subr.bf16.mxu0 0
    %556 = vmatpush2.bf16.msra.mxu0 0
    %557 = vmatprep.subr.bf16.mxu0 0
    %558 = vmatpush2.bf16.msra.mxu0 0
    %559 = vmatprep.subr.bf16.mxu0 0
    %560 = vmatpush2.bf16.msra.mxu0 0
    %561 = vmatprep.subr.bf16.mxu0 0
    %562 = vmatpush2.bf16.msra.mxu0 0
    %563 = vmatprep.subr.bf16.mxu0 0
    %564 = vmatpush2.bf16.msra.mxu0 0
    %565 = vmatprep.subr.bf16.mxu0 0
    %566 = vmatpush2.bf16.msra.mxu0 0
    %567 = vmatprep.subr.bf16.mxu0 0
    %568 = vmatpush2.bf16.msra.mxu0 0
    %569 = vmatprep.subr.bf16.mxu0 0
    %570 = vmatpush2.bf16.msra.mxu0 0
    %571 = vmatprep.mubr.bf16.mxu0 0
    %572 = vmatmul.mubr.bf16.gmra.mxu0 %v430
    %v573 = vpop.f32.mrf.mxu0
    %v574 = vadd.f32 %v452, %v573
    %v575 = vpop.f32.mrf.mxu0
    %v576 = vadd.f32 %v456, %v575
    %v577 = vpop.f32.mrf.mxu0
    %v578 = vadd.f32 %v452, %v577
    %v579 = vpop.f32.mrf.mxu0
    %v580 = vadd.f32 %v456, %v579
    %581 = vdwg.mxu0
    %582 = vst [vmem:[#allocation11] sm:$0xff] %v574
    %583 = vst [vmem:[#allocation11 + $0x8] sm:$0xff] %v576
    %584 = vst [vmem:[#allocation11 + $0x10] sm:$0xff] %v578
    %585 = vst [vmem:[#allocation11 + $0x18] sm:$0xff] %v580
    // Predicated region
    $region58: #{tpu_custom_call.1} parent=1 // pred_check
      _
    $region59: #{tpu_custom_call.1} parent=1 // pred_check_branch
      %587 = sbr.rel (0) target = $region61
    $region60: #{tpu_custom_call.1} parent=1 // pred_region
      %s589 = ssub.s32 512, 512
      %590 = vsyncadd [#allocation4], %s589
      %s591 = sshll.u32 [#allocation11], 4
      %s592 = int_to_ptr.vmem [resolvable:$true] %s591
      %597 = dma.vmem_to_hbm [thread:$0]  %s592, 512, %s9, [#allocation4], 256, 256, 16
    $region61: #{tpu_custom_call.1} parent=1 // pred_fallthru
      _
    // Predicated region
    $region62: #{tpu_custom_call.1} parent=1 // pred_check
      _
    $region63: #{tpu_custom_call.1} parent=1 // pred_check_branch
      %599 = sbr.rel (0) target = $region65
    $region64: #{tpu_custom_call.1} parent=1 // pred_region
      %600 = dma.done [#allocation4], 512
    $region65: #{tpu_custom_call.1} parent=1 // pred_fallthru
      _
    %601 = vsyncpa [#allocation3], 1
    %602 = vsyncpa [#allocation6], 1
    %603 = vsyncpa [#allocation9], 1
    %604 = vsyncpa [#allocation4], 1

</llo_original>
